<compile_context>
chip_gen: v6e
topology: v6e:2x2x1
jax: 0.10.0
libtpu: 0.0.40
codegen_flags: <defaults>
</compile_context>

<pallas_src>
import jax
import jax.numpy as jnp
from jax.experimental import pallas as pl
from jax.experimental.pallas import tpu as pltpu


def _data_embedding_kernel(x_ref, w_ref, pe_ref, o_ref):
    # x_ref: (TL, C_eff); w_ref: (C_eff, D_eff); pe_ref: (TL, D_eff);
    # o_ref: (TL, D_eff).  PE already contains the Conv1d bias.
    x = x_ref[...].astype(jnp.float32)
    w = w_ref[...].astype(jnp.float32)
    pe = pe_ref[...].astype(jnp.float32)
    y = jnp.dot(x, w, preferred_element_type=jnp.float32) + pe
    o_ref[...] = y.astype(o_ref.dtype)


def data_embedding(x, weight, bias):
    """x: (B, L, C_in); weight: (d_model, C_in) (PyTorch Conv1d layout with the
    kernel_size=1 dim squeezed); bias: (d_model,). Returns (B, L, d_model)."""
    B, L, C_in = x.shape
    d_model = weight.shape[0]
    dtype = x.dtype

    # ---- fixed sinusoidal PE (batch-invariant), computed once in f32 ----
    channels = ((d_model + 1) // 2) * 2                       # PyTorch pads to even
    pos = jnp.arange(L, dtype=jnp.float32)
    inv_freq = 1.0 / (10000.0 ** (jnp.arange(0, channels, 2, dtype=jnp.float32) / channels))
    sin_inp = pos[:, None] * inv_freq[None, :]                # (L, channels/2)
    pe = jnp.stack([jnp.sin(sin_inp), jnp.cos(sin_inp)], axis=-1)
    pe = pe.reshape(L, channels)[:, :d_model]                 # (L, D)
    pe = pe + bias.astype(jnp.float32)[None, :]               # fold Conv1d bias into PE

    w_t = jnp.transpose(weight, (1, 0)).astype(jnp.float32)   # (C_in, D)

    # ---- lane-dense folding: g consecutive positions -> lane dim ----
    g = 1
    if d_model < 128 and 128 % d_model == 0 and L % (128 // d_model) == 0:
        g = 128 // d_model
    L_f, C_eff, D_eff = L // g, g * C_in, g * d_model

    if g > 1:
        x_in = x.reshape(B, L_f, C_eff)                       # free metadata reshape
        pe_in = pe.reshape(L_f, D_eff)
        w_in = jnp.zeros((C_eff, D_eff), dtype=jnp.float32)   # block-diagonal weight
        for i in range(g):
            w_in = w_in.at[i * C_in:(i + 1) * C_in,
                           i * d_model:(i + 1) * d_model].set(w_t)
    else:
        x_in, pe_in, w_in = x, pe, w_t

    pe_in = pe_in.astype(dtype)                               # narrow PE in HBM
    w_in = w_in.astype(dtype)

    # ---- L tiling: fixed TL (<= 512), cdiv grid with partial last tile ----
    if L_f % 8 == 0:
        TL = min(512, L_f)                                    # multiple of 8
    elif L_f < 512:
        TL = L_f                                              # full-extent block (legal)
    else:
        TL = 512                                              # partial last tile masked
    l_tiles = pl.cdiv(L_f, TL)

    itemsize = jnp.dtype(dtype).itemsize
    blk_bytes = (TL * C_eff + 2 * TL * D_eff + C_eff * D_eff) * itemsize
    # Double-buffered footprint with headroom; stay inside v7x's 32 MiB scoped VMEM.
    vmem_limit = int(min(max(4 * blk_bytes, 16 * 1024 * 1024), 32 * 1024 * 1024))

    out = pl.pallas_call(
        _data_embedding_kernel,
        out_shape=jax.ShapeDtypeStruct((B, L_f, D_eff), dtype),
        grid_spec=pltpu.PrefetchScalarGridSpec(
            num_scalar_prefetch=0,
            # B innermost: PE's block index (l, 0) does not change across the
            # inner loop, so its DMA is skipped -> one PE sweep total.
            grid=(l_tiles, B),
            in_specs=[
                pl.BlockSpec((pl.Squeezed(), TL, C_eff), lambda l, b: (b, l, 0)),
                pl.BlockSpec((C_eff, D_eff), lambda l, b: (0, 0)),
                pl.BlockSpec((TL, D_eff), lambda l, b: (l, 0)),
            ],
            out_specs=pl.BlockSpec((pl.Squeezed(), TL, D_eff),
                                   lambda l, b: (b, l, 0)),
        ),
        compiler_params=pltpu.CompilerParams(
            dimension_semantics=("parallel", "parallel"),
            vmem_limit_bytes=vmem_limit),
    )(x_in, w_in, pe_in)

    return out.reshape(B, L, d_model) if g > 1 else out


def _reference(x, weight, bias):
    # Pure-JAX reference mirroring the PyTorch forward (eval mode).
    B, L, C_in = x.shape
    d_model = weight.shape[0]
    x1 = jnp.einsum("blc,dc->bld", x, weight, precision="highest") + bias[None, None, :]
    channels = ((d_model + 1) // 2) * 2
    pos = jnp.arange(L, dtype=jnp.float32)
    inv_freq = 1.0 / (10000.0 ** (jnp.arange(0, channels, 2, dtype=jnp.float32) / channels))
    sin_inp = pos[:, None] * inv_freq[None, :]
    emb = jnp.stack([jnp.sin(sin_inp), jnp.cos(sin_inp)], axis=-1)
    emb = emb.reshape(L, channels)[:, :d_model]
    return emb[None, :, :] + x1


if __name__ == "__main__":
    B, L, C_in, d_model = 2, 8, 4, 32

    key = jax.random.PRNGKey(0)
    kx, kw, kb = jax.random.split(key, 3)
    x = jax.random.normal(kx, (B, L, C_in), dtype=jnp.float32)
    # Deterministic "init" of Conv1d(enc_in, d_model, kernel_size=1) params.
    weight = jax.random.normal(kw, (d_model, C_in), dtype=jnp.float32) * 0.1
    bias = jax.random.normal(kb, (d_model,), dtype=jnp.float32) * 0.1

    out = jax.block_until_ready(data_embedding(x, weight, bias))

    ref = _reference(x, weight, bias)
    assert out.shape == (B, L, d_model)
    # Tolerance leaves headroom for the MXU's bf16-pass decomposition of the
    # f32 projection vs the XLA "highest" reference; any real bug (wrong PE
    # interleave, missing bias, bad index map) is orders of magnitude larger.
    assert jnp.allclose(out, ref, atol=2e-3, rtol=2e-3), "mismatch vs reference"

    print("KERNEL_OK")
</pallas_src>

<mosaic_0001>
module attributes {stable_mosaic.version = 11 : i64} {
  func.func @_data_embedding_kernel(%arg0: i32, %arg1: i32, %arg2: memref<1x2x16xf32, #tpu.memory_space<vmem>>, %arg3: memref<16x128xf32, #tpu.memory_space<vmem>>, %arg4: memref<2x128xf32, #tpu.memory_space<vmem>>, %arg5: memref<1x2x128xf32, #tpu.memory_space<vmem>>) attributes {dimension_semantics = [#tpu.dimension_semantics<parallel>, #tpu.dimension_semantics<parallel>], iteration_bounds = array<i64: 1, 2>, scalar_prefetch = 0 : i64, scratch_operands = 0 : i64, tpu.core_type = #tpu.core_type<tc>, window_params = [{transform_indices = @transform_0, window_bounds = array<i64: 1, 2, 16>}, {pipeline_mode = #tpu.pipeline_mode<synchronous>, transform_indices = @transform_1, window_bounds = array<i64: 16, 128>}, {transform_indices = @transform_2, window_bounds = array<i64: 2, 128>}, {transform_indices = @transform_3, window_bounds = array<i64: 1, 2, 128>}]} {
    %c0 = arith.constant 0 : index
    %c0_0 = arith.constant 0 : index
    %c0_1 = arith.constant 0 : index
    %0 = vector.load %arg2[%c0, %c0_0, %c0_1] : memref<1x2x16xf32, #tpu.memory_space<vmem>>, vector<1x2x16xf32>
    %1 = vector.shape_cast %0 : vector<1x2x16xf32> to vector<2x16xf32>
    %c0_2 = arith.constant 0 : index
    %c0_3 = arith.constant 0 : index
    %2 = vector.load %arg3[%c0_2, %c0_3] : memref<16x128xf32, #tpu.memory_space<vmem>>, vector<16x128xf32>
    %c0_4 = arith.constant 0 : index
    %c0_5 = arith.constant 0 : index
    %3 = vector.load %arg4[%c0_4, %c0_5] : memref<2x128xf32, #tpu.memory_space<vmem>>, vector<2x128xf32>
    %cst = arith.constant dense<0.000000e+00> : vector<2x128xf32>
    %4 = tpu.matmul %1, %2, %cst {dimension_numbers = #tpu.dot_dimension_numbers<[1], [0], [0], [1], [0, 0, 1, 1], [], []>} : vector<2x16xf32>, vector<16x128xf32>, vector<2x128xf32> -> vector<2x128xf32>
    %5 = arith.addf %4, %3 : vector<2x128xf32>
    %c0_6 = arith.constant 0 : index
    %c0_7 = arith.constant 0 : index
    %c0_8 = arith.constant 0 : index
    %6 = vector.load %arg5[%c0_6, %c0_7, %c0_8] : memref<1x2x128xf32, #tpu.memory_space<vmem>>, vector<1x2x128xf32>
    %7 = vector.shape_cast %6 : vector<1x2x128xf32> to vector<2x128xf32>
    %8 = vector.shape_cast %5 : vector<2x128xf32> to vector<1x2x128xf32>
    tpu.vector_store %arg5[%c0_6, %c0_7, %c0_8], %8 {strides = array<i32>} : memref<1x2x128xf32, #tpu.memory_space<vmem>>, vector<1x2x128xf32>,
    return
  }
  func.func @transform_0(%arg0: i32, %arg1: i32) -> (i32, i32, i32) {
    %c0_i32 = arith.constant 0 : i32
    %c0_i32_0 = arith.constant 0 : i32
    return %arg1, %arg0, %c0_i32 : i32, i32, i32
  }
  func.func @transform_1(%arg0: i32, %arg1: i32) -> (i32, i32) {
    %c0_i32 = arith.constant 0 : i32
    %c0_i32_0 = arith.constant 0 : i32
    %c0_i32_1 = arith.constant 0 : i32
    return %c0_i32, %c0_i32_0 : i32, i32
  }
  func.func @transform_2(%arg0: i32, %arg1: i32) -> (i32, i32) {
    %c0_i32 = arith.constant 0 : i32
    %c0_i32_0 = arith.constant 0 : i32
    return %arg0, %c0_i32 : i32, i32
  }
  func.func @transform_3(%arg0: i32, %arg1: i32) -> (i32, i32, i32) {
    %c0_i32 = arith.constant 0 : i32
    %c0_i32_0 = arith.constant 0 : i32
    return %arg1, %arg0, %c0_i32 : i32, i32, i32
  }
}

</mosaic_0001>

<llo_original>
// kernel: tpu_custom_call.1
$region0: #{tpu_custom_call.1}
  #allocation0 [shape = 'u32[]', space=smem, size = 0x4, offset = 0x4, fixed_abs, tag = 'smem constant byte address 0x4 - core index']
  #allocation1 [shape = 'u32[144,128]{1,0:T(1,128)}', space=vmem, size = 0x12000, scoped, tag = 'internal scratch']
  %s0 = inlined_call_operand.hbm [shape: f32[2,2,16], index: 0, kind: input, shape index: {}]
  %s1 = inlined_call_operand.hbm [shape: f32[16,128], index: 1, kind: input, shape index: {}]
  %s2 = inlined_call_operand.vmem [shape: f32[2,128], index: 2, kind: input, shape index: {}]
  %s3 = inlined_call_operand.hbm [shape: f32[2,2,128], index: 3, kind: output, shape index: {}]
  %s4 = sld [smem:[#allocation0]]
  $region53: #{tpu_custom_call.1} parent=0
    _
  %s6 = ssub.s32 1, %s4
  %s7 = scalar_select 0, %s6, %s4
  $region1: #{tpu_custom_call.1} parent=0
    #allocation2 [shape = 'u8[2048]{0}', space=vmem, size = 0x800, scoped, tag = 'input window, operand 0']
    #allocation3 [shape = 's32[2]{0}', space=sflag, size = 0x8, scoped, tag = 'scoped memory for tpu_custom_call.1']
    #allocation4 [shape = 's32[2]{0}', space=sflag, size = 0x8, scoped, tag = 'scoped memory for tpu_custom_call.1']
    #allocation5 [shape = 'u8[8192]{0}', space=vmem, size = 0x2000, scoped, tag = 'input window, operand 1, single buffered']
    #allocation6 [shape = 's32[1]{0}', space=sflag, size = 0x4, scoped, tag = 'scoped memory for tpu_custom_call.1']
    #allocation7 [shape = 'u8[2048]{0}', space=vmem, size = 0x800, scoped, tag = 'output window, operand 0']
    %8 = vsyncpa [#allocation3], 0
    %s9 = scalar_lea.sflag [#allocation3], 1
    %10 = vsyncpa %s9, 0
    %11 = vsyncpa [#allocation6], 0
    %12 = vsyncpa [#allocation4], 0
    %s13 = scalar_lea.sflag [#allocation4], 1
    %14 = vsyncpa %s13, 0
    loop: start=0, step=1, limit=4
    $region2: #{tpu_custom_call.1} parent=1 // loop_pre_header
      _
    $region3: #{tpu_custom_call.1} parent=1 // loop_header
      %s16 = sphi 0, %s20
      %p17 = scmp.ge.s32.totalorder %s16, 4
      %s23 = sphi 0, %s35
      %s24 = sphi 0, %s31
      %s25 = sphi 0, %s23
      %s26 = sphi 0, %s24
      %s27 = sphi 0, %s25
      %s28 = sphi 0, %s26
      %s40 = sphi 0, %s42
      %s43 = sphi 0, %s40
      %s44 = sphi 0, %s43
      %s60 = sphi 0, %s44
      %s64 = sphi 0, %s64
      %s66 = sphi 0, %s64
      %s67 = sphi 0, %s66
      %s81 = sphi 0, %s67
      %s87 = sphi 0, %s89
      %s90 = sphi 0, %s87
      %s91 = sphi 0, %s90
      %s107 = sphi 0, %s91
      %s115 = sphi 0, %s117
      %s118 = sphi 0, %s115
      %s119 = sphi 0, %s118
      %s135 = sphi 0, %s119
    $region4: #{tpu_custom_call.1} parent=1 // loop_header_branch
      %19 = sbr.rel (%p17) target = $region8
    $region5: #{tpu_custom_call.1} parent=1 // loop_body
      %s21 = ssub.s32 %s16, 1
      %s22 = ssub.s32 %s16, 2
      %s29 = sadd.s32 1, %s24
      %p30 = scmp.ge.s32.totalorder %s29, 2
      %s31 = scalar_select %p30, 0, %s29
      %s32 = sadd.s32 1, %s23
      %s33 = scalar_select %p30, %s32, %s23
      %p34 = scmp.ge.s32.totalorder %s33, 1
      %s35 = scalar_select %p34, 0, %s33
      %s36 = ssub.s32 %s24, %s31
      %s37 = ssub.s32 %s23, %s35
      %s38 = sor.u32 %s36, %s37
      %p39 = scmp.eq.s32.totalorder %s38, 0
      %s41 = sadd.s32 %s40, 1
      %s42 = scalar_select %p39, %s40, %s41
      %p45 = pneg %p39
      %p46 = scmp.eq.s32.totalorder %s16, 1
      %p47 = por %p45, %p46
      %p48 = scmp.ne.s32.totalorder %s40, %s43
      %p49 = scmp.eq.s32.totalorder %s16, 0
      %p50 = por %p48, %p49
      %p51 = scmp.ne.s32.totalorder %s40, %s43
      %p52 = scmp.eq.s32.totalorder %s21, 1
      %p53 = por %p51, %p52
      %p54 = scmp.ne.s32.totalorder %s43, %s44
      %p55 = scmp.eq.s32.totalorder %s21, 0
      %p56 = por %p54, %p55
      %p57 = scmp.ne.s32.totalorder %s43, %s44
      %p58 = scmp.eq.s32.totalorder %s22, 1
      %p59 = por %p57, %p58
      %p61 = scmp.ne.s32.totalorder %s44, %s60
      %p62 = scmp.eq.s32.totalorder %s22, 0
      %p63 = por %p61, %p62
      %s65 = sadd.s32 %s64, 1
      %p68 = scmp.eq.s32.totalorder %s16, 1
      %p69 = scmp.ne.s32.totalorder %s64, %s66
      %p70 = scmp.eq.s32.totalorder %s16, 0
      %p71 = por %p69, %p70
      %p72 = scmp.ne.s32.totalorder %s64, %s66
      %p73 = scmp.eq.s32.totalorder %s21, 1
      %p74 = por %p72, %p73
      %p75 = scmp.ne.s32.totalorder %s66, %s67
      %p76 = scmp.eq.s32.totalorder %s21, 0
      %p77 = por %p75, %p76
      %p78 = scmp.ne.s32.totalorder %s66, %s67
      %p79 = scmp.eq.s32.totalorder %s22, 1
      %p80 = por %p78, %p79
      %p82 = scmp.ne.s32.totalorder %s67, %s81
      %p83 = scmp.eq.s32.totalorder %s22, 0
      %p84 = por %p82, %p83
      %s85 = ssub.s32 %s23, %s35
      %p86 = scmp.eq.s32.totalorder %s85, 0
      %s88 = sadd.s32 %s87, 1
      %s89 = scalar_select %p86, %s87, %s88
      %p92 = pneg %p86
      %p93 = scmp.eq.s32.totalorder %s16, 1
      %p94 = por %p92, %p93
      %p95 = scmp.ne.s32.totalorder %s87, %s90
      %p96 = scmp.eq.s32.totalorder %s16, 0
      %p97 = por %p95, %p96
      %p98 = scmp.ne.s32.totalorder %s87, %s90
      %p99 = scmp.eq.s32.totalorder %s21, 1
      %p100 = por %p98, %p99
      %p101 = scmp.ne.s32.totalorder %s90, %s91
      %p102 = scmp.eq.s32.totalorder %s21, 0
      %p103 = por %p101, %p102
      %p104 = scmp.ne.s32.totalorder %s90, %s91
      %p105 = scmp.eq.s32.totalorder %s22, 1
      %p106 = por %p104, %p105
      %p108 = scmp.ne.s32.totalorder %s91, %s107
      %p109 = scmp.eq.s32.totalorder %s22, 0
      %p110 = por %p108, %p109
      %s111 = ssub.s32 %s24, %s31
      %s112 = ssub.s32 %s23, %s35
      %s113 = sor.u32 %s111, %s112
      %p114 = scmp.eq.s32.totalorder %s113, 0
      %s116 = sadd.s32 %s115, 1
      %s117 = scalar_select %p114, %s115, %s116
      %p120 = pneg %p114
      %p121 = scmp.eq.s32.totalorder %s16, 1
      %p122 = por %p120, %p121
      %p123 = scmp.ne.s32.totalorder %s115, %s118
      %p124 = scmp.eq.s32.totalorder %s16, 0
      %p125 = por %p123, %p124
      %p126 = scmp.ne.s32.totalorder %s115, %s118
      %p127 = scmp.eq.s32.totalorder %s21, 1
      %p128 = por %p126, %p127
      %p129 = scmp.ne.s32.totalorder %s118, %s119
      %p130 = scmp.eq.s32.totalorder %s21, 0
      %p131 = por %p129, %p130
      %p132 = scmp.ne.s32.totalorder %s118, %s119
      %p133 = scmp.eq.s32.totalorder %s22, 1
      %p134 = por %p132, %p133
      %p136 = scmp.ne.s32.totalorder %s119, %s135
      %p137 = scmp.eq.s32.totalorder %s22, 0
      %p138 = por %p136, %p137
      %p139 = scmp.le.s32.totalorder 1, %s16
      %p140 = scmp.lt.s32.totalorder %s16, 3
      %p141 = pnand %p139, %p140
      %p142 = pneg %p141
      // Predicated region
      $region9: #{tpu_custom_call.1} parent=5 // pred_check
        _
      $region10: #{tpu_custom_call.1} parent=5 // pred_check_branch
        %144 = sbr.rel (%p141) target = $region12
      $region11: #{tpu_custom_call.1} parent=5 // pred_region
        %s145 = ssub.s32 %s16, 1
        // Predicated region
        $region13: #{tpu_custom_call.1} parent=11 // pred_check
          %p146 = pneg %p77
        $region14: #{tpu_custom_call.1} parent=11 // pred_check_branch
          %148 = sbr.rel (%p146) target = $region16
        $region15: #{tpu_custom_call.1} parent=11 // pred_region
          %s150 = ssub.s32 256, 256
          %151 = vsyncadd [#allocation6], %s150
          %s152 = sshll.u32 [#allocation5], 4
          %s153 = int_to_ptr.vmem [resolvable:$true] %s152
          %158 = dma.hbm_to_vmem [thread:$0]  %s1, 256, %s153, [#allocation6], 128, 128, 8
        $region16: #{tpu_custom_call.1} parent=11 // pred_fallthru
          _
        // Predicated region
        $region17: #{tpu_custom_call.1} parent=11 // pred_check
          %p159 = pneg %p103
        $region18: #{tpu_custom_call.1} parent=11 // pred_check_branch
          %161 = sbr.rel (%p159) target = $region20
        $region19: #{tpu_custom_call.1} parent=11 // pred_region
          %p162 = scmp.lt.s32.totalorder %s25, 0
          %s163 = scalar_select %p162, %s25, 0
          %s164 = smul.addr %s163, 2
          %s165 = scalar_lea.vmem %s2, %s164
        $region20: #{tpu_custom_call.1} parent=11 // pred_fallthru
          _
      $region12: #{tpu_custom_call.1} parent=5 // pred_fallthru
        _
      %p166 = scmp.lt.s32.totalorder %s16, 2
      // Predicated region
      $region21: #{tpu_custom_call.1} parent=5 // pred_check
        %p167 = pneg %p166
      $region22: #{tpu_custom_call.1} parent=5 // pred_check_branch
        %169 = sbr.rel (%p167) target = $region24
      $region23: #{tpu_custom_call.1} parent=5 // pred_region
        // Predicated region
        $region25: #{tpu_custom_call.1} parent=23 // pred_check
          %p170 = pneg %p50
        $region26: #{tpu_custom_call.1} parent=23 // pred_check_branch
          %172 = sbr.rel (%p170) target = $region28
        $region27: #{tpu_custom_call.1} parent=23 // pred_region
          %s173 = sand.u32 %s40, 1
          %s174 = scalar_lea.sflag [#allocation3], %s173
          %s175 = sand.u32 %s40, 1
          %s176 = smul.addr %s175, 2
          %s177 = scalar_lea.vmem [#allocation2], %s176
          %s179 = ssub.s32 32, 32
          %180 = vsyncadd %s174, %s179
          %s181 = sadd.s32 %s23, %s24
          %s182 = smul.addr %s181, 32
          %s183 = scalar_lea.hbm %s0, %s182
          %s185 = sshll.u32 %s177, 4
          %s186 = int_to_ptr.vmem [resolvable:$true] %s185
          %188 = dma.hbm_to_vmem [thread:$0]  %s183, 32, %s186, %s174
        $region28: #{tpu_custom_call.1} parent=23 // pred_fallthru
          _
      $region24: #{tpu_custom_call.1} parent=5 // pred_fallthru
        _
      %p189 = scmp.le.s32.totalorder 1, %s16
      %p190 = scmp.lt.s32.totalorder %s16, 3
      %p191 = pnand %p189, %p190
      %p192 = pneg %p191
      // Predicated region
      $region29: #{tpu_custom_call.1} parent=5 // pred_check
        _
      $region30: #{tpu_custom_call.1} parent=5 // pred_check_branch
        %194 = sbr.rel (%p191) target = $region32
      $region31: #{tpu_custom_call.1} parent=5 // pred_region
        %s195 = ssub.s32 %s16, 1
        %s196 = sand.u32 %s43, 1
        %s197 = scalar_lea.sflag [#allocation3], %s196
        %s198 = sand.u32 %s43, 1
        %s199 = smul.addr %s198, 2
        %s200 = scalar_lea.vmem [#allocation2], %s199
        // Predicated region
        $region33: #{tpu_custom_call.1} parent=31 // pred_check
          %p201 = pneg %p56
        $region34: #{tpu_custom_call.1} parent=31 // pred_check_branch
          %203 = sbr.rel (%p201) target = $region36
        $region35: #{tpu_custom_call.1} parent=31 // pred_region
          %204 = dma.done %s197, 32
        $region36: #{tpu_custom_call.1} parent=31 // pred_fallthru
          _
        // Predicated region
        $region37: #{tpu_custom_call.1} parent=31 // pred_check
          %p205 = pneg %p77
        $region38: #{tpu_custom_call.1} parent=31 // pred_check_branch
          %207 = sbr.rel (%p205) target = $region40
        $region39: #{tpu_custom_call.1} parent=31 // pred_region
          %208 = dma.done [#allocation6], 256
        $region40: #{tpu_custom_call.1} parent=31 // pred_fallthru
          _
        %s209 = sand.u32 %s43, 1
        %s210 = scalar_lea.sflag [#allocation3], %s209
        %s211 = sand.u32 %s43, 1
        %s212 = smul.addr %s211, 2
        %s213 = scalar_lea.vmem [#allocation2], %s212
        %p214 = pneg %p56
        %p215 = pneg %p53
        %p216 = pneg %p77
        %p217 = pneg %p74
        %p218 = scmp.lt.s32.totalorder %s25, 0
        %s219 = scalar_select %p218, %s25, 0
        %s220 = smul.addr %s219, 2
        %s221 = scalar_lea.vmem %s2, %s220
        %p222 = pneg %p103
        %p223 = pneg %p100
        %p224 = pneg %p131
        %p225 = pneg %p128
        %s226 = sand.u32 %s118, 1
        %s227 = scalar_lea.sflag [#allocation4], %s226
        %s228 = sand.u32 %s118, 1
        %s229 = smul.addr %s228, 2
        %s230 = scalar_lea.vmem [#allocation7], %s229
        %p231 = scmp.lt.s32.totalorder %s25, 0
        %s232 = scalar_select %p231, %s25, 0
        %s233 = smul.addr %s232, 2
        %s234 = scalar_lea.vmem %s2, %s233
        %v235 = vld [vmem:[%s200] sm:$0x3]
        %v236 = vld [vmem:[#allocation5] sm:$0xff]
        %v237 = vld [vmem:[#allocation5 + $0x8] sm:$0xff]
        %v238 = vld [vmem:[%s234] sm:$0x3]
        %vm239 = vcmask 130048
        %v241 = vsel %vm239, %v235, 0
        %243 = vmatprep.subr.mxu0 0.0
        %244 = vmatpush1.msra.mxu0 0.0
        %245 = vmatprep.subr.mxu0 0.0
        %246 = vmatpush1.msra.mxu0 0.0
        %247 = vmatprep.subr.mxu0 0.0
        %248 = vmatpush1.msra.mxu0 0.0
        %249 = vmatprep.subr.mxu0 0.0
        %250 = vmatpush1.msra.mxu0 0.0
        %251 = vmatprep.subr.mxu0 0.0
        %252 = vmatpush1.msra.mxu0 0.0
        %253 = vmatprep.subr.mxu0 0.0
        %254 = vmatpush1.msra.mxu0 0.0
        %255 = vmatprep.subr.mxu0 0.0
        %256 = vmatpush1.msra.mxu0 0.0
        %257 = vmatprep.subr.mxu0 0.0
        %258 = vmatpush1.msra.mxu0 0.0
        %259 = vmatprep.subr.mxu0 0.0
        %260 = vmatpush1.msra.mxu0 0.0
        %261 = vmatprep.subr.mxu0 0.0
        %262 = vmatpush1.msra.mxu0 0.0
        %263 = vmatprep.subr.mxu0 0.0
        %264 = vmatpush1.msra.mxu0 0.0
        %265 = vmatprep.subr.mxu0 0.0
        %266 = vmatpush1.msra.mxu0 0.0
        %267 = vmatprep.subr.mxu0 0.0
        %268 = vmatpush1.msra.mxu0 0.0
        %269 = vmatprep.subr.mxu0 0.0
        %270 = vmatpush1.msra.mxu0 0.0
        %271 = vmatprep.subr.mxu0 0.0
        %272 = vmatpush1.msra.mxu0 %v237
        %273 = vmatprep.subr.mxu0 0.0
        %274 = vmatpush1.msra.mxu0 %v236
        %275 = vmatprep.subr.mxu0 0.0
        %276 = vmatpush2.msra.mxu0 0.0
        %277 = vmatprep.subr.mxu0 0.0
        %278 = vmatpush2.msra.mxu0 0.0
        %279 = vmatprep.subr.mxu0 0.0
        %280 = vmatpush2.msra.mxu0 0.0
        %281 = vmatprep.subr.mxu0 0.0
        %282 = vmatpush2.msra.mxu0 0.0
        %283 = vmatprep.subr.mxu0 0.0
        %284 = vmatpush2.msra.mxu0 0.0
        %285 = vmatprep.subr.mxu0 0.0
        %286 = vmatpush2.msra.mxu0 0.0
        %287 = vmatprep.subr.mxu0 0.0
        %288 = vmatpush2.msra.mxu0 0.0
        %289 = vmatprep.subr.mxu0 0.0
        %290 = vmatpush2.msra.mxu0 0.0
        %291 = vmatprep.subr.mxu0 0.0
        %292 = vmatpush2.msra.mxu0 0.0
        %293 = vmatprep.subr.mxu0 0.0
        %294 = vmatpush2.msra.mxu0 0.0
        %295 = vmatprep.subr.mxu0 0.0
        %296 = vmatpush2.msra.mxu0 0.0
        %297 = vmatprep.subr.mxu0 0.0
        %298 = vmatpush2.msra.mxu0 0.0
        %299 = vmatprep.subr.mxu0 0.0
        %300 = vmatpush2.msra.mxu0 0.0
        %301 = vmatprep.subr.mxu0 0.0
        %302 = vmatpush2.msra.mxu0 0.0
        %303 = vmatprep.subr.mxu0 0.0
        %304 = vmatpush2.msra.mxu0 0.0
        %305 = vmatprep.subr.mxu0 0.0
        %306 = vmatpush2.msra.mxu0 0.0
        %307 = vmatprep.mubr.f32.mxu0 0.0
        %308 = vmatmul.mubr.f32.gmra.mxu0 %v241
        %v309 = vpop.f32.mrf.mxu0
        %v310 = vadd.f32 %v238, %v309
        %v311 = vpop.f32.mrf.mxu0
        %312 = vdwg.mxu0
        %313 = vst [vmem:[%s230] sm:$0x3] %v310
        %s314 = sand.u32 %s118, 1
        %s315 = scalar_lea.sflag [#allocation4], %s314
        %s316 = sand.u32 %s118, 1
        %s317 = smul.addr %s316, 2
        %s318 = scalar_lea.vmem [#allocation7], %s317
        // Predicated region
        $region41: #{tpu_custom_call.1} parent=31 // pred_check
          %p319 = pneg %p128
        $region42: #{tpu_custom_call.1} parent=31 // pred_check_branch
          %321 = sbr.rel (%p319) target = $region44
        $region43: #{tpu_custom_call.1} parent=31 // pred_region
          %s323 = ssub.s32 32, 32
          %324 = vsyncadd %s315, %s323
          %s325 = sadd.s32 %s25, %s26
          %s326 = smul.addr %s325, 32
          %s327 = scalar_lea.hbm %s3, %s326
          %s329 = sshll.u32 %s318, 4
          %s330 = int_to_ptr.vmem [resolvable:$true] %s329
          %332 = dma.vmem_to_hbm [thread:$0]  %s330, 32, %s327, %s315
        $region44: #{tpu_custom_call.1} parent=31 // pred_fallthru
          _
      $region32: #{tpu_custom_call.1} parent=5 // pred_fallthru
        _
      %p333 = scmp.le.s32.totalorder 2, %s16
      // Predicated region
      $region45: #{tpu_custom_call.1} parent=5 // pred_check
        %p334 = pneg %p333
      $region46: #{tpu_custom_call.1} parent=5 // pred_check_branch
        %336 = sbr.rel (%p334) target = $region48
      $region47: #{tpu_custom_call.1} parent=5 // pred_region
        %s337 = ssub.s32 %s16, 2
        // Predicated region
        $region49: #{tpu_custom_call.1} parent=47 // pred_check
          %p338 = pneg %p134
        $region50: #{tpu_custom_call.1} parent=47 // pred_check_branch
          %340 = sbr.rel (%p338) target = $region52
        $region51: #{tpu_custom_call.1} parent=47 // pred_region
          %s341 = sand.u32 %s119, 1
          %s342 = scalar_lea.sflag [#allocation4], %s341
          %s343 = sand.u32 %s119, 1
          %s344 = smul.addr %s343, 2
          %s345 = scalar_lea.vmem [#allocation7], %s344
          %346 = dma.done %s342, 32
        $region52: #{tpu_custom_call.1} parent=47 // pred_fallthru
          _
      $region48: #{tpu_custom_call.1} parent=5 // pred_fallthru
        _
    $region6: #{tpu_custom_call.1} parent=1 // loop_footer
      %s20 = sadd.s32 1, %s16
    $region7: #{tpu_custom_call.1} parent=1 // loop_footer_branch
      %15 = sbr.rel target = $region3
    $region8: #{tpu_custom_call.1} parent=1 // loop_exit
      _
    %347 = vsyncpa [#allocation3], 1
    %s348 = scalar_lea.sflag [#allocation3], 1
    %349 = vsyncpa %s348, 1
    %350 = vsyncpa [#allocation6], 1
    %351 = vsyncpa [#allocation4], 1
    %s352 = scalar_lea.sflag [#allocation4], 1
    %353 = vsyncpa %s352, 1

</llo_original>
